<compile_context>
chip_gen: v6e
topology: v6e:2x2x1
jax: 0.10.0
libtpu: 0.0.40
codegen_flags: <defaults>
</compile_context>

<pallas_src>
import functools

import jax
import jax.numpy as jnp
from jax.experimental import pallas as pl
from jax.experimental.pallas import tpu as pltpu

LANE = 128   # vreg lane width
SUBLANE = 8  # vreg sublane count (f32)


def mlp_kernel(x_ref, w1_ref, b1_ref, w2_ref, b2_ref, w3_ref, b3_ref, o_ref):
    cdt = w1_ref.dtype  # compute dtype of the MXU operands (f32 or bf16)
    # Layer 1: Linear + ReLU (MXU matmul with f32 accumulation, VPU elementwise)
    h = jnp.dot(x_ref[...], w1_ref[...], preferred_element_type=jnp.float32)
    h = jnp.maximum(h + b1_ref[...], 0.0).astype(cdt)
    # Layer 2: Linear + ReLU
    h = jnp.dot(h, w2_ref[...], preferred_element_type=jnp.float32)
    h = jnp.maximum(h + b2_ref[...], 0.0).astype(cdt)
    # Layer 3: Linear (no activation); output tile is lane-dense (TILE_B, C_P)
    h = jnp.dot(h, w3_ref[...], preferred_element_type=jnp.float32)
    o_ref[...] = (h + b3_ref[...]).astype(o_ref.dtype)


def _round_up(n, m):
    return ((n + m - 1) // m) * m


def _pad_to(a, shape):
    pads = [(0, t - s) for s, t in zip(a.shape, shape)]
    if any(p[1] for p in pads):
        return jnp.pad(a, pads)
    return a


def _choose_tile_b(batch):
    """Batch tile: sublane-aligned; >=2 grid steps for mid-size batches (v7x
    dual-TC sharding); 256-row tiles for large batches (fills v6e/v7x MXU)."""
    b_al = _round_up(batch, SUBLANE)
    if b_al <= 128:
        return b_al
    if b_al <= 512:
        return 128
    return 256


def make_forward(params, *, compute_dtype=jnp.float32):
    """Pads params once (hoisted out of the per-call path) and returns a jitted
    forward(x) -> [B, num_classes]. wN: [in, out]; bN: [1, out]."""
    w1, b1, w2, b2, w3, b3 = params
    in_f, hidden = w1.shape
    classes = w3.shape[1]

    # Lane-dense padded output dims (zero padding is mathematically inert:
    # zero weight cols/rows, zero bias, ReLU(0)=0).
    H_P = _round_up(hidden, LANE)
    C_P = _round_up(classes, LANE)

    w1p = _pad_to(w1, (in_f, H_P)).astype(compute_dtype)   # K dim left unpadded
    b1p = _pad_to(b1, (1, H_P)).astype(jnp.float32)
    w2p = _pad_to(w2, (H_P, H_P)).astype(compute_dtype)
    b2p = _pad_to(b2, (1, H_P)).astype(jnp.float32)
    w3p = _pad_to(w3, (H_P, C_P)).astype(compute_dtype)
    b3p = _pad_to(b3, (1, C_P)).astype(jnp.float32)

    @jax.jit
    def forward(x):
        B = x.shape[0]
        out_dtype = x.dtype

        TILE_B = _choose_tile_b(B)
        B_P = _round_up(B, TILE_B)

        xp = x
        if B_P != B:
            xp = jnp.pad(x, ((0, B_P - B), (0, 0)))
        xp = xp.astype(compute_dtype)

        grid = (B_P // TILE_B,)

        # Cost estimate on padded shapes: x/out streamed over the whole padded
        # batch, weights/biases counted once (VMEM-resident across the grid).
        w_bytes = jnp.dtype(compute_dtype).itemsize
        o_bytes = jnp.dtype(out_dtype).itemsize
        flops = 2 * B_P * (in_f * H_P + H_P * H_P + H_P * C_P)
        bytes_accessed = (
            w_bytes * B_P * in_f
            + w_bytes * (in_f * H_P + H_P * H_P + H_P * C_P)
            + 4 * (H_P + H_P + C_P)
            + o_bytes * B_P * C_P
        )

        out_padded = pl.pallas_call(
            mlp_kernel,
            out_shape=jax.ShapeDtypeStruct((B_P, C_P), out_dtype),
            grid=grid,
            in_specs=[
                pl.BlockSpec((TILE_B, in_f), lambda i: (i, 0)),  # x tile (pipelined over batch)
                pl.BlockSpec((in_f, H_P), lambda i: (0, 0)),     # w1 (VMEM-resident)
                pl.BlockSpec((1, H_P), lambda i: (0, 0)),        # b1
                pl.BlockSpec((H_P, H_P), lambda i: (0, 0)),      # w2
                pl.BlockSpec((1, H_P), lambda i: (0, 0)),        # b2
                pl.BlockSpec((H_P, C_P), lambda i: (0, 0)),      # w3
                pl.BlockSpec((1, C_P), lambda i: (0, 0)),        # b3
            ],
            out_specs=pl.BlockSpec((TILE_B, C_P), lambda i: (i, 0)),
            compiler_params=pltpu.CompilerParams(
                dimension_semantics=("parallel",),  # batch axis shards across TCs on v7x
            ),
            cost_estimate=pl.CostEstimate(
                flops=flops, transcendentals=0, bytes_accessed=bytes_accessed
            ),
        )(xp, w1p, b1p, w2p, b2p, w3p, b3p)

        # Slice back to the true (unpadded) output; fuses under jit.
        return out_padded[:B, :classes]

    return forward


def init_params(key, input_size, hidden_size, num_classes, dtype=jnp.float32):
    """Deterministic init mimicking nn.Linear's U(-1/sqrt(fan_in), 1/sqrt(fan_in)).
    Weights stored as [in, out] (transpose of PyTorch's [out, in])."""
    ks = jax.random.split(key, 6)

    def linear(kw, kb, fan_in, fan_out):
        bound = 1.0 / jnp.sqrt(fan_in)
        w = jax.random.uniform(kw, (fan_in, fan_out), dtype, -bound, bound)
        b = jax.random.uniform(kb, (1, fan_out), dtype, -bound, bound)
        return w, b

    w1, b1 = linear(ks[0], ks[1], input_size, hidden_size)
    w2, b2 = linear(ks[2], ks[3], hidden_size, hidden_size)
    w3, b3 = linear(ks[4], ks[5], hidden_size, num_classes)
    return w1, b1, w2, b2, w3, b3


if __name__ == "__main__":
    batch, input_size, hidden_size, num_classes = 8, 64, 32, 16

    key = jax.random.PRNGKey(0)
    kx, kp = jax.random.split(key)
    x = jax.random.normal(kx, (batch, input_size), jnp.float32)
    params = init_params(kp, input_size, hidden_size, num_classes)

    # Reference in plain JAX.
    w1, b1, w2, b2, w3, b3 = params
    ref = jnp.maximum(x @ w1 + b1, 0.0)
    ref = jnp.maximum(ref @ w2 + b2, 0.0)
    ref = ref @ w3 + b3

    # f32 compute path (default): must hit the 1e-5 reference tolerance.
    forward_f32 = make_forward(params, compute_dtype=jnp.float32)
    out = jax.block_until_ready(forward_f32(x))
    assert out.shape == (batch, num_classes)
    assert jnp.allclose(out, ref, atol=1e-5, rtol=1e-5)

    # bf16 operand path (recommended for v6e/v7x MXU throughput at scale):
    # f32 accumulation + f32 bias/ReLU, looser tolerance from bf16 operands.
    forward_bf16 = make_forward(params, compute_dtype=jnp.bfloat16)
    out_bf16 = jax.block_until_ready(forward_bf16(x))
    assert out_bf16.shape == (batch, num_classes)
    assert jnp.allclose(out_bf16, ref, atol=5e-2, rtol=5e-2)

    print("KERNEL_OK")
</pallas_src>

<mosaic_0001>
module attributes {stable_mosaic.version = 11 : i64} {
  func.func @mlp_kernel(%arg0: i32, %arg1: memref<8x64xf32, #tpu.memory_space<vmem>>, %arg2: memref<64x128xf32, #tpu.memory_space<vmem>>, %arg3: memref<1x128xf32, #tpu.memory_space<vmem>>, %arg4: memref<128x128xf32, #tpu.memory_space<vmem>>, %arg5: memref<1x128xf32, #tpu.memory_space<vmem>>, %arg6: memref<128x128xf32, #tpu.memory_space<vmem>>, %arg7: memref<1x128xf32, #tpu.memory_space<vmem>>, %arg8: memref<8x128xf32, #tpu.memory_space<vmem>>) attributes {dimension_semantics = [#tpu.dimension_semantics<parallel>], iteration_bounds = array<i64: 1>, scalar_prefetch = 0 : i64, scratch_operands = 0 : i64, tpu.core_type = #tpu.core_type<tc>, window_params = [{transform_indices = @transform_0, window_bounds = array<i64: 8, 64>}, {pipeline_mode = #tpu.pipeline_mode<synchronous>, transform_indices = @transform_1, window_bounds = array<i64: 64, 128>}, {pipeline_mode = #tpu.pipeline_mode<synchronous>, transform_indices = @transform_2, window_bounds = array<i64: 1, 128>}, {pipeline_mode = #tpu.pipeline_mode<synchronous>, transform_indices = @transform_3, window_bounds = array<i64: 128, 128>}, {pipeline_mode = #tpu.pipeline_mode<synchronous>, transform_indices = @transform_4, window_bounds = array<i64: 1, 128>}, {pipeline_mode = #tpu.pipeline_mode<synchronous>, transform_indices = @transform_5, window_bounds = array<i64: 128, 128>}, {pipeline_mode = #tpu.pipeline_mode<synchronous>, transform_indices = @transform_6, window_bounds = array<i64: 1, 128>}, {transform_indices = @transform_7, window_bounds = array<i64: 8, 128>}]} {
    %c0 = arith.constant 0 : index
    %c0_0 = arith.constant 0 : index
    %0 = vector.load %arg1[%c0, %c0_0] : memref<8x64xf32, #tpu.memory_space<vmem>>, vector<8x64xf32>
    %c0_1 = arith.constant 0 : index
    %c0_2 = arith.constant 0 : index
    %1 = vector.load %arg2[%c0_1, %c0_2] : memref<64x128xf32, #tpu.memory_space<vmem>>, vector<64x128xf32>
    %cst = arith.constant dense<0.000000e+00> : vector<8x128xf32>
    %2 = tpu.matmul %0, %1, %cst {dimension_numbers = #tpu.dot_dimension_numbers<[1], [0], [0], [1], [0, 0, 1, 1], [], []>} : vector<8x64xf32>, vector<64x128xf32>, vector<8x128xf32> -> vector<8x128xf32>
    %c0_3 = arith.constant 0 : index
    %c0_4 = arith.constant 0 : index
    %3 = vector.load %arg3[%c0_3, %c0_4] : memref<1x128xf32, #tpu.memory_space<vmem>>, vector<1x128xf32>
    %4 = vector.broadcast %3 : vector<1x128xf32> to vector<8x128xf32>
    %5 = arith.addf %2, %4 : vector<8x128xf32>
    %cst_5 = arith.constant 0.000000e+00 : f32
    %6 = vector.broadcast %cst_5 : f32 to vector<8x128xf32>
    %7 = arith.maximumf %5, %6 : vector<8x128xf32>
    %c0_6 = arith.constant 0 : index
    %c0_7 = arith.constant 0 : index
    %8 = vector.load %arg4[%c0_6, %c0_7] : memref<128x128xf32, #tpu.memory_space<vmem>>, vector<128x128xf32>
    %cst_8 = arith.constant dense<0.000000e+00> : vector<8x128xf32>
    %9 = tpu.matmul %7, %8, %cst_8 {dimension_numbers = #tpu.dot_dimension_numbers<[1], [0], [0], [1], [0, 0, 1, 1], [], []>} : vector<8x128xf32>, vector<128x128xf32>, vector<8x128xf32> -> vector<8x128xf32>
    %c0_9 = arith.constant 0 : index
    %c0_10 = arith.constant 0 : index
    %10 = vector.load %arg5[%c0_9, %c0_10] : memref<1x128xf32, #tpu.memory_space<vmem>>, vector<1x128xf32>
    %11 = vector.broadcast %10 : vector<1x128xf32> to vector<8x128xf32>
    %12 = arith.addf %9, %11 : vector<8x128xf32>
    %cst_11 = arith.constant 0.000000e+00 : f32
    %13 = vector.broadcast %cst_11 : f32 to vector<8x128xf32>
    %14 = arith.maximumf %12, %13 : vector<8x128xf32>
    %c0_12 = arith.constant 0 : index
    %c0_13 = arith.constant 0 : index
    %15 = vector.load %arg6[%c0_12, %c0_13] : memref<128x128xf32, #tpu.memory_space<vmem>>, vector<128x128xf32>
    %cst_14 = arith.constant dense<0.000000e+00> : vector<8x128xf32>
    %16 = tpu.matmul %14, %15, %cst_14 {dimension_numbers = #tpu.dot_dimension_numbers<[1], [0], [0], [1], [0, 0, 1, 1], [], []>} : vector<8x128xf32>, vector<128x128xf32>, vector<8x128xf32> -> vector<8x128xf32>
    %c0_15 = arith.constant 0 : index
    %c0_16 = arith.constant 0 : index
    %17 = vector.load %arg7[%c0_15, %c0_16] : memref<1x128xf32, #tpu.memory_space<vmem>>, vector<1x128xf32>
    %18 = vector.broadcast %17 : vector<1x128xf32> to vector<8x128xf32>
    %19 = arith.addf %16, %18 : vector<8x128xf32>
    %c0_17 = arith.constant 0 : index
    %c0_18 = arith.constant 0 : index
    %20 = vector.load %arg8[%c0_17, %c0_18] : memref<8x128xf32, #tpu.memory_space<vmem>>, vector<8x128xf32>
    tpu.vector_store %arg8[%c0_17, %c0_18], %19 {strides = array<i32>} : memref<8x128xf32, #tpu.memory_space<vmem>>, vector<8x128xf32>,
    return
  }
  func.func @transform_0(%arg0: i32) -> (i32, i32) {
    %c0_i32 = arith.constant 0 : i32
    %c0_i32_0 = arith.constant 0 : i32
    return %arg0, %c0_i32 : i32, i32
  }
  func.func @transform_1(%arg0: i32) -> (i32, i32) {
    %c0_i32 = arith.constant 0 : i32
    %c0_i32_0 = arith.constant 0 : i32
    %c0_i32_1 = arith.constant 0 : i32
    return %c0_i32, %c0_i32_0 : i32, i32
  }
  func.func @transform_2(%arg0: i32) -> (i32, i32) {
    %c0_i32 = arith.constant 0 : i32
    %c0_i32_0 = arith.constant 0 : i32
    %c0_i32_1 = arith.constant 0 : i32
    return %c0_i32, %c0_i32_0 : i32, i32
  }
  func.func @transform_3(%arg0: i32) -> (i32, i32) {
    %c0_i32 = arith.constant 0 : i32
    %c0_i32_0 = arith.constant 0 : i32
    %c0_i32_1 = arith.constant 0 : i32
    return %c0_i32, %c0_i32_0 : i32, i32
  }
  func.func @transform_4(%arg0: i32) -> (i32, i32) {
    %c0_i32 = arith.constant 0 : i32
    %c0_i32_0 = arith.constant 0 : i32
    %c0_i32_1 = arith.constant 0 : i32
    return %c0_i32, %c0_i32_0 : i32, i32
  }
  func.func @transform_5(%arg0: i32) -> (i32, i32) {
    %c0_i32 = arith.constant 0 : i32
    %c0_i32_0 = arith.constant 0 : i32
    %c0_i32_1 = arith.constant 0 : i32
    return %c0_i32, %c0_i32_0 : i32, i32
  }
  func.func @transform_6(%arg0: i32) -> (i32, i32) {
    %c0_i32 = arith.constant 0 : i32
    %c0_i32_0 = arith.constant 0 : i32
    %c0_i32_1 = arith.constant 0 : i32
    return %c0_i32, %c0_i32_0 : i32, i32
  }
  func.func @transform_7(%arg0: i32) -> (i32, i32) {
    %c0_i32 = arith.constant 0 : i32
    %c0_i32_0 = arith.constant 0 : i32
    return %arg0, %c0_i32 : i32, i32
  }
}

</mosaic_0001>

<llo_original>
// kernel: forward.1
$region0: #{forward.1}
  #allocation0 [shape = 'u32[]', space=smem, size = 0x4, offset = 0x4, fixed_abs, tag = 'smem constant byte address 0x4 - core index']
  #allocation1 [shape = 'u32[144,128]{1,0:T(1,128)}', space=vmem, size = 0x12000, scoped, tag = 'internal scratch']
  %s0 = inlined_call_operand.hbm [shape: f32[8,64], index: 0, kind: input, shape index: {}]
  %s1 = inlined_call_operand.hbm [shape: f32[64,128], index: 1, kind: input, shape index: {}]
  %s2 = inlined_call_operand.vmem [shape: f32[1,128], index: 2, kind: input, shape index: {}]
  %s3 = inlined_call_operand.hbm [shape: f32[128,128], index: 3, kind: input, shape index: {}]
  %s4 = inlined_call_operand.vmem [shape: f32[1,128], index: 4, kind: input, shape index: {}]
  %s5 = inlined_call_operand.hbm [shape: f32[128,128], index: 5, kind: input, shape index: {}]
  %s6 = inlined_call_operand.vmem [shape: f32[1,128], index: 6, kind: input, shape index: {}]
  %s7 = inlined_call_operand.hbm [shape: f32[8,128], index: 7, kind: output, shape index: {}]
  %s8 = sld [smem:[#allocation0]]
  $region54: #{forward.1} parent=0
    _
  %s10 = ssub.s32 1, %s8
  %s11 = scalar_select 0, %s10, %s8
  $region1: #{forward.1} parent=0
    #allocation2 [shape = 'u8[4096]{0}', space=vmem, size = 0x1000, scoped, tag = 'input window, operand 0, single buffered']
    #allocation3 [shape = 's32[1]{0}', space=sflag, size = 0x4, scoped, tag = 'scoped memory for forward.1']
    #allocation4 [shape = 's32[1]{0}', space=sflag, size = 0x4, scoped, tag = 'scoped memory for forward.1']
    #allocation5 [shape = 'u8[32768]{0}', space=vmem, size = 0x8000, scoped, tag = 'input window, operand 1, single buffered']
    #allocation6 [shape = 's32[1]{0}', space=sflag, size = 0x4, scoped, tag = 'scoped memory for forward.1']
    #allocation7 [shape = 'u8[65536]{0}', space=vmem, size = 0x10000, scoped, tag = 'input window, operand 3, single buffered']
    #allocation8 [shape = 'u8[65536]{0}', space=vmem, size = 0x10000, scoped, tag = 'input window, operand 5, single buffered']
    #allocation9 [shape = 's32[1]{0}', space=sflag, size = 0x4, scoped, tag = 'scoped memory for forward.1']
    #allocation10 [shape = 'u8[4096]{0}', space=vmem, size = 0x1000, scoped, tag = 'output window, operand 0, single buffered']
    %12 = vsyncpa [#allocation3], 0
    %13 = vsyncpa [#allocation6], 0
    %14 = vsyncpa [#allocation9], 0
    %15 = vsyncpa [#allocation4], 0
    // Predicated region
    $region2: #{forward.1} parent=1 // pred_check
      _
    $region3: #{forward.1} parent=1 // pred_check_branch
      %17 = sbr.rel (0) target = $region5
    $region4: #{forward.1} parent=1 // pred_region
      %s19 = ssub.s32 128, 128
      %20 = vsyncadd [#allocation3], %s19
      %s22 = sshll.u32 [#allocation2], 4
      %s23 = int_to_ptr.vmem [resolvable:$true] %s22
      %25 = dma.hbm_to_vmem [thread:$0]  %s0, 128, %s23, [#allocation3]
    $region5: #{forward.1} parent=1 // pred_fallthru
      _
    // Predicated region
    $region6: #{forward.1} parent=1 // pred_check
      _
    $region7: #{forward.1} parent=1 // pred_check_branch
      %27 = sbr.rel (0) target = $region9
    $region8: #{forward.1} parent=1 // pred_region
      %s29 = ssub.s32 1024, 1024
      %30 = vsyncadd [#allocation6], %s29
      %s31 = sshll.u32 [#allocation5], 4
      %s32 = int_to_ptr.vmem [resolvable:$true] %s31
      %37 = dma.hbm_to_vmem [thread:$0]  %s1, 1024, %s32, [#allocation6], 128, 128, 8
    $region9: #{forward.1} parent=1 // pred_fallthru
      _
    // Predicated region
    $region10: #{forward.1} parent=1 // pred_check
      _
    $region11: #{forward.1} parent=1 // pred_check_branch
      %39 = sbr.rel (0) target = $region13
    $region12: #{forward.1} parent=1 // pred_region
      _
    $region13: #{forward.1} parent=1 // pred_fallthru
      _
    // Predicated region
    $region14: #{forward.1} parent=1 // pred_check
      _
    $region15: #{forward.1} parent=1 // pred_check_branch
      %41 = sbr.rel (0) target = $region17
    $region16: #{forward.1} parent=1 // pred_region
      %s43 = ssub.s32 2048, 2048
      %44 = vsyncadd [#allocation6], %s43
      %s45 = sshll.u32 [#allocation7], 4
      %s46 = int_to_ptr.vmem [resolvable:$true] %s45
      %51 = dma.hbm_to_vmem [thread:$0]  %s3, 2048, %s46, [#allocation6], 128, 128, 8
    $region17: #{forward.1} parent=1 // pred_fallthru
      _
    // Predicated region
    $region18: #{forward.1} parent=1 // pred_check
      _
    $region19: #{forward.1} parent=1 // pred_check_branch
      %53 = sbr.rel (0) target = $region21
    $region20: #{forward.1} parent=1 // pred_region
      _
    $region21: #{forward.1} parent=1 // pred_fallthru
      _
    // Predicated region
    $region22: #{forward.1} parent=1 // pred_check
      _
    $region23: #{forward.1} parent=1 // pred_check_branch
      %55 = sbr.rel (0) target = $region25
    $region24: #{forward.1} parent=1 // pred_region
      %s57 = ssub.s32 2048, 2048
      %58 = vsyncadd [#allocation9], %s57
      %s59 = sshll.u32 [#allocation8], 4
      %s60 = int_to_ptr.vmem [resolvable:$true] %s59
      %65 = dma.hbm_to_vmem [thread:$0]  %s5, 2048, %s60, [#allocation9], 128, 128, 8
    $region25: #{forward.1} parent=1 // pred_fallthru
      _
    // Predicated region
    $region26: #{forward.1} parent=1 // pred_check
      _
    $region27: #{forward.1} parent=1 // pred_check_branch
      %67 = sbr.rel (0) target = $region29
    $region28: #{forward.1} parent=1 // pred_region
      _
    $region29: #{forward.1} parent=1 // pred_fallthru
      _
    // Predicated region
    $region30: #{forward.1} parent=1 // pred_check
      _
    $region31: #{forward.1} parent=1 // pred_check_branch
      %69 = sbr.rel (0) target = $region33
    $region32: #{forward.1} parent=1 // pred_region
      %70 = dma.done [#allocation3], 128
    $region33: #{forward.1} parent=1 // pred_fallthru
      _
    // Predicated region
    $region34: #{forward.1} parent=1 // pred_check
      _
    $region35: #{forward.1} parent=1 // pred_check_branch
      %72 = sbr.rel (0) target = $region37
    $region36: #{forward.1} parent=1 // pred_region
      %73 = dma.done [#allocation6], 1024
    $region37: #{forward.1} parent=1 // pred_fallthru
      _
    // Predicated region
    $region38: #{forward.1} parent=1 // pred_check
      _
    $region39: #{forward.1} parent=1 // pred_check_branch
      %75 = sbr.rel (0) target = $region41
    $region40: #{forward.1} parent=1 // pred_region
      %76 = dma.done [#allocation6], 2048
    $region41: #{forward.1} parent=1 // pred_fallthru
      _
    // Predicated region
    $region42: #{forward.1} parent=1 // pred_check
      _
    $region43: #{forward.1} parent=1 // pred_check_branch
      %78 = sbr.rel (0) target = $region45
    $region44: #{forward.1} parent=1 // pred_region
      %79 = dma.done [#allocation9], 2048
    $region45: #{forward.1} parent=1 // pred_fallthru
      _
    %v80 = vld [vmem:[#allocation2] sm:$0xff]
    %v81 = vld [vmem:[#allocation5] sm:$0xff]
    %v82 = vld [vmem:[#allocation5 + $0x8] sm:$0xff]
    %v83 = vld [vmem:[#allocation5 + $0x10] sm:$0xff]
    %v84 = vld [vmem:[#allocation5 + $0x18] sm:$0xff]
    %v85 = vld [vmem:[#allocation5 + $0x20] sm:$0xff]
    %v86 = vld [vmem:[#allocation5 + $0x28] sm:$0xff]
    %v87 = vld [vmem:[#allocation5 + $0x30] sm:$0xff]
    %v88 = vld [vmem:[#allocation5 + $0x38] sm:$0xff]
    %v89 = vld [vmem:[%s2] sm:$0x1]
    %v91 = vlaneseq
    %v92 = vshrl.u32 %v91, 7
    %v93 = vsub.s32 0, %v92
    %v94 = vrot.slane %v89, %v93
    %vm96 = vcmask 523264
    %v98 = vsel %vm96, %v80, 0
    %100 = vmatprep.subr.mxu0 0.0
    %101 = vmatpush1.msra.mxu0 0.0
    %102 = vmatprep.subr.mxu0 0.0
    %103 = vmatpush1.msra.mxu0 0.0
    %104 = vmatprep.subr.mxu0 0.0
    %105 = vmatpush1.msra.mxu0 0.0
    %106 = vmatprep.subr.mxu0 0.0
    %107 = vmatpush1.msra.mxu0 0.0
    %108 = vmatprep.subr.mxu0 0.0
    %109 = vmatpush1.msra.mxu0 0.0
    %110 = vmatprep.subr.mxu0 0.0
    %111 = vmatpush1.msra.mxu0 0.0
    %112 = vmatprep.subr.mxu0 0.0
    %113 = vmatpush1.msra.mxu0 0.0
    %114 = vmatprep.subr.mxu0 0.0
    %115 = vmatpush1.msra.mxu0 0.0
    %116 = vmatprep.subr.mxu0 0.0
    %117 = vmatpush1.msra.mxu0 %v88
    %118 = vmatprep.subr.mxu0 0.0
    %119 = vmatpush1.msra.mxu0 %v87
    %120 = vmatprep.subr.mxu0 0.0
    %121 = vmatpush1.msra.mxu0 %v86
    %122 = vmatprep.subr.mxu0 0.0
    %123 = vmatpush1.msra.mxu0 %v85
    %124 = vmatprep.subr.mxu0 0.0
    %125 = vmatpush1.msra.mxu0 %v84
    %126 = vmatprep.subr.mxu0 0.0
    %127 = vmatpush1.msra.mxu0 %v83
    %128 = vmatprep.subr.mxu0 0.0
    %129 = vmatpush1.msra.mxu0 %v82
    %130 = vmatprep.subr.mxu0 0.0
    %131 = vmatpush1.msra.mxu0 %v81
    %132 = vmatprep.subr.mxu0 0.0
    %133 = vmatpush2.msra.mxu0 0.0
    %134 = vmatprep.subr.mxu0 0.0
    %135 = vmatpush2.msra.mxu0 0.0
    %136 = vmatprep.subr.mxu0 0.0
    %137 = vmatpush2.msra.mxu0 0.0
    %138 = vmatprep.subr.mxu0 0.0
    %139 = vmatpush2.msra.mxu0 0.0
    %140 = vmatprep.subr.mxu0 0.0
    %141 = vmatpush2.msra.mxu0 0.0
    %142 = vmatprep.subr.mxu0 0.0
    %143 = vmatpush2.msra.mxu0 0.0
    %144 = vmatprep.subr.mxu0 0.0
    %145 = vmatpush2.msra.mxu0 0.0
    %146 = vmatprep.subr.mxu0 0.0
    %147 = vmatpush2.msra.mxu0 0.0
    %148 = vmatprep.subr.mxu0 0.0
    %149 = vmatpush2.msra.mxu0 0.0
    %150 = vmatprep.subr.mxu0 0.0
    %151 = vmatpush2.msra.mxu0 0.0
    %152 = vmatprep.subr.mxu0 0.0
    %153 = vmatpush2.msra.mxu0 0.0
    %154 = vmatprep.subr.mxu0 0.0
    %155 = vmatpush2.msra.mxu0 0.0
    %156 = vmatprep.subr.mxu0 0.0
    %157 = vmatpush2.msra.mxu0 0.0
    %158 = vmatprep.subr.mxu0 0.0
    %159 = vmatpush2.msra.mxu0 0.0
    %160 = vmatprep.subr.mxu0 0.0
    %161 = vmatpush2.msra.mxu0 0.0
    %162 = vmatprep.subr.mxu0 0.0
    %163 = vmatpush2.msra.mxu0 0.0
    %164 = vmatprep.mubr.f32.mxu0 0.0
    %165 = vmatmul.mubr.f32.gmra.mxu0 %v98
    %v166 = vpop.f32.mrf.mxu0
    %v167 = vadd.f32 %v94, %v166
    %v168 = vpop.f32.mrf.mxu0
    %169 = vdwg.mxu0
    %v170 = vmax.f32 %v167, 0.0
    %v171 = vld [vmem:[#allocation7] sm:$0xff]
    %v172 = vld [vmem:[#allocation7 + $0x8] sm:$0xff]
    %v173 = vld [vmem:[#allocation7 + $0x10] sm:$0xff]
    %v174 = vld [vmem:[#allocation7 + $0x18] sm:$0xff]
    %v175 = vld [vmem:[#allocation7 + $0x20] sm:$0xff]
    %v176 = vld [vmem:[#allocation7 + $0x28] sm:$0xff]
    %v177 = vld [vmem:[#allocation7 + $0x30] sm:$0xff]
    %v178 = vld [vmem:[#allocation7 + $0x38] sm:$0xff]
    %v179 = vld [vmem:[#allocation7 + $0x40] sm:$0xff]
    %v180 = vld [vmem:[#allocation7 + $0x48] sm:$0xff]
    %v181 = vld [vmem:[#allocation7 + $0x50] sm:$0xff]
    %v182 = vld [vmem:[#allocation7 + $0x58] sm:$0xff]
    %v183 = vld [vmem:[#allocation7 + $0x60] sm:$0xff]
    %v184 = vld [vmem:[#allocation7 + $0x68] sm:$0xff]
    %v185 = vld [vmem:[#allocation7 + $0x70] sm:$0xff]
    %v186 = vld [vmem:[#allocation7 + $0x78] sm:$0xff]
    %v187 = vld [vmem:[%s4] sm:$0x1]
    %v189 = vlaneseq
    %v190 = vshrl.u32 %v189, 7
    %v191 = vsub.s32 0, %v190
    %v192 = vrot.slane %v187, %v191
    %194 = vmatprep.subr.mxu0 0.0
    %195 = vmatpush1.msra.mxu0 %v186
    %196 = vmatprep.subr.mxu0 0.0
    %197 = vmatpush1.msra.mxu0 %v185
    %198 = vmatprep.subr.mxu0 0.0
    %199 = vmatpush1.msra.mxu0 %v184
    %200 = vmatprep.subr.mxu0 0.0
    %201 = vmatpush1.msra.mxu0 %v183
    %202 = vmatprep.subr.mxu0 0.0
    %203 = vmatpush1.msra.mxu0 %v182
    %204 = vmatprep.subr.mxu0 0.0
    %205 = vmatpush1.msra.mxu0 %v181
    %206 = vmatprep.subr.mxu0 0.0
    %207 = vmatpush1.msra.mxu0 %v180
    %208 = vmatprep.subr.mxu0 0.0
    %209 = vmatpush1.msra.mxu0 %v179
    %210 = vmatprep.subr.mxu0 0.0
    %211 = vmatpush1.msra.mxu0 %v178
    %212 = vmatprep.subr.mxu0 0.0
    %213 = vmatpush1.msra.mxu0 %v177
    %214 = vmatprep.subr.mxu0 0.0
    %215 = vmatpush1.msra.mxu0 %v176
    %216 = vmatprep.subr.mxu0 0.0
    %217 = vmatpush1.msra.mxu0 %v175
    %218 = vmatprep.subr.mxu0 0.0
    %219 = vmatpush1.msra.mxu0 %v174
    %220 = vmatprep.subr.mxu0 0.0
    %221 = vmatpush1.msra.mxu0 %v173
    %222 = vmatprep.subr.mxu0 0.0
    %223 = vmatpush1.msra.mxu0 %v172
    %224 = vmatprep.subr.mxu0 0.0
    %225 = vmatpush1.msra.mxu0 %v171
    %226 = vmatprep.subr.mxu0 0.0
    %227 = vmatpush2.msra.mxu0 0.0
    %228 = vmatprep.subr.mxu0 0.0
    %229 = vmatpush2.msra.mxu0 0.0
    %230 = vmatprep.subr.mxu0 0.0
    %231 = vmatpush2.msra.mxu0 0.0
    %232 = vmatprep.subr.mxu0 0.0
    %233 = vmatpush2.msra.mxu0 0.0
    %234 = vmatprep.subr.mxu0 0.0
    %235 = vmatpush2.msra.mxu0 0.0
    %236 = vmatprep.subr.mxu0 0.0
    %237 = vmatpush2.msra.mxu0 0.0
    %238 = vmatprep.subr.mxu0 0.0
    %239 = vmatpush2.msra.mxu0 0.0
    %240 = vmatprep.subr.mxu0 0.0
    %241 = vmatpush2.msra.mxu0 0.0
    %242 = vmatprep.subr.mxu0 0.0
    %243 = vmatpush2.msra.mxu0 0.0
    %244 = vmatprep.subr.mxu0 0.0
    %245 = vmatpush2.msra.mxu0 0.0
    %246 = vmatprep.subr.mxu0 0.0
    %247 = vmatpush2.msra.mxu0 0.0
    %248 = vmatprep.subr.mxu0 0.0
    %249 = vmatpush2.msra.mxu0 0.0
    %250 = vmatprep.subr.mxu0 0.0
    %251 = vmatpush2.msra.mxu0 0.0
    %252 = vmatprep.subr.mxu0 0.0
    %253 = vmatpush2.msra.mxu0 0.0
    %254 = vmatprep.subr.mxu0 0.0
    %255 = vmatpush2.msra.mxu0 0.0
    %256 = vmatprep.subr.mxu0 0.0
    %257 = vmatpush2.msra.mxu0 0.0
    %258 = vmatprep.mubr.f32.mxu0 0.0
    %259 = vmatmul.mubr.f32.gmra.mxu0 %v170
    %v260 = vpop.f32.mrf.mxu0
    %v261 = vadd.f32 %v192, %v260
    %v262 = vpop.f32.mrf.mxu0
    %263 = vdwg.mxu0
    %v264 = vmax.f32 %v261, 0.0
    %v265 = vld [vmem:[#allocation8] sm:$0xff]
    %v266 = vld [vmem:[#allocation8 + $0x8] sm:$0xff]
    %v267 = vld [vmem:[#allocation8 + $0x10] sm:$0xff]
    %v268 = vld [vmem:[#allocation8 + $0x18] sm:$0xff]
    %v269 = vld [vmem:[#allocation8 + $0x20] sm:$0xff]
    %v270 = vld [vmem:[#allocation8 + $0x28] sm:$0xff]
    %v271 = vld [vmem:[#allocation8 + $0x30] sm:$0xff]
    %v272 = vld [vmem:[#allocation8 + $0x38] sm:$0xff]
    %v273 = vld [vmem:[#allocation8 + $0x40] sm:$0xff]
    %v274 = vld [vmem:[#allocation8 + $0x48] sm:$0xff]
    %v275 = vld [vmem:[#allocation8 + $0x50] sm:$0xff]
    %v276 = vld [vmem:[#allocation8 + $0x58] sm:$0xff]
    %v277 = vld [vmem:[#allocation8 + $0x60] sm:$0xff]
    %v278 = vld [vmem:[#allocation8 + $0x68] sm:$0xff]
    %v279 = vld [vmem:[#allocation8 + $0x70] sm:$0xff]
    %v280 = vld [vmem:[#allocation8 + $0x78] sm:$0xff]
    %v281 = vld [vmem:[%s6] sm:$0x1]
    %v283 = vlaneseq
    %v284 = vshrl.u32 %v283, 7
    %v285 = vsub.s32 0, %v284
    %v286 = vrot.slane %v281, %v285
    %288 = vmatprep.subr.mxu0 0.0
    %289 = vmatpush1.msra.mxu0 %v280
    %290 = vmatprep.subr.mxu0 0.0
    %291 = vmatpush1.msra.mxu0 %v279
    %292 = vmatprep.subr.mxu0 0.0
    %293 = vmatpush1.msra.mxu0 %v278
    %294 = vmatprep.subr.mxu0 0.0
    %295 = vmatpush1.msra.mxu0 %v277
    %296 = vmatprep.subr.mxu0 0.0
    %297 = vmatpush1.msra.mxu0 %v276
    %298 = vmatprep.subr.mxu0 0.0
    %299 = vmatpush1.msra.mxu0 %v275
    %300 = vmatprep.subr.mxu0 0.0
    %301 = vmatpush1.msra.mxu0 %v274
    %302 = vmatprep.subr.mxu0 0.0
    %303 = vmatpush1.msra.mxu0 %v273
    %304 = vmatprep.subr.mxu0 0.0
    %305 = vmatpush1.msra.mxu0 %v272
    %306 = vmatprep.subr.mxu0 0.0
    %307 = vmatpush1.msra.mxu0 %v271
    %308 = vmatprep.subr.mxu0 0.0
    %309 = vmatpush1.msra.mxu0 %v270
    %310 = vmatprep.subr.mxu0 0.0
    %311 = vmatpush1.msra.mxu0 %v269
    %312 = vmatprep.subr.mxu0 0.0
    %313 = vmatpush1.msra.mxu0 %v268
    %314 = vmatprep.subr.mxu0 0.0
    %315 = vmatpush1.msra.mxu0 %v267
    %316 = vmatprep.subr.mxu0 0.0
    %317 = vmatpush1.msra.mxu0 %v266
    %318 = vmatprep.subr.mxu0 0.0
    %319 = vmatpush1.msra.mxu0 %v265
    %320 = vmatprep.subr.mxu0 0.0
    %321 = vmatpush2.msra.mxu0 0.0
    %322 = vmatprep.subr.mxu0 0.0
    %323 = vmatpush2.msra.mxu0 0.0
    %324 = vmatprep.subr.mxu0 0.0
    %325 = vmatpush2.msra.mxu0 0.0
    %326 = vmatprep.subr.mxu0 0.0
    %327 = vmatpush2.msra.mxu0 0.0
    %328 = vmatprep.subr.mxu0 0.0
    %329 = vmatpush2.msra.mxu0 0.0
    %330 = vmatprep.subr.mxu0 0.0
    %331 = vmatpush2.msra.mxu0 0.0
    %332 = vmatprep.subr.mxu0 0.0
    %333 = vmatpush2.msra.mxu0 0.0
    %334 = vmatprep.subr.mxu0 0.0
    %335 = vmatpush2.msra.mxu0 0.0
    %336 = vmatprep.subr.mxu0 0.0
    %337 = vmatpush2.msra.mxu0 0.0
    %338 = vmatprep.subr.mxu0 0.0
    %339 = vmatpush2.msra.mxu0 0.0
    %340 = vmatprep.subr.mxu0 0.0
    %341 = vmatpush2.msra.mxu0 0.0
    %342 = vmatprep.subr.mxu0 0.0
    %343 = vmatpush2.msra.mxu0 0.0
    %344 = vmatprep.subr.mxu0 0.0
    %345 = vmatpush2.msra.mxu0 0.0
    %346 = vmatprep.subr.mxu0 0.0
    %347 = vmatpush2.msra.mxu0 0.0
    %348 = vmatprep.subr.mxu0 0.0
    %349 = vmatpush2.msra.mxu0 0.0
    %350 = vmatprep.subr.mxu0 0.0
    %351 = vmatpush2.msra.mxu0 0.0
    %352 = vmatprep.mubr.f32.mxu0 0.0
    %353 = vmatmul.mubr.f32.gmra.mxu0 %v264
    %v354 = vpop.f32.mrf.mxu0
    %v355 = vadd.f32 %v286, %v354
    %v356 = vpop.f32.mrf.mxu0
    %357 = vdwg.mxu0
    %358 = vst [vmem:[#allocation10] sm:$0xff] %v355
    // Predicated region
    $region46: #{forward.1} parent=1 // pred_check
      _
    $region47: #{forward.1} parent=1 // pred_check_branch
      %360 = sbr.rel (0) target = $region49
    $region48: #{forward.1} parent=1 // pred_region
      %s362 = ssub.s32 128, 128
      %363 = vsyncadd [#allocation4], %s362
      %s365 = sshll.u32 [#allocation10], 4
      %s366 = int_to_ptr.vmem [resolvable:$true] %s365
      %368 = dma.vmem_to_hbm [thread:$0]  %s366, 128, %s7, [#allocation4]
    $region49: #{forward.1} parent=1 // pred_fallthru
      _
    // Predicated region
    $region50: #{forward.1} parent=1 // pred_check
      _
    $region51: #{forward.1} parent=1 // pred_check_branch
      %370 = sbr.rel (0) target = $region53
    $region52: #{forward.1} parent=1 // pred_region
      %371 = dma.done [#allocation4], 128
    $region53: #{forward.1} parent=1 // pred_fallthru
      _
    %372 = vsyncpa [#allocation3], 1
    %373 = vsyncpa [#allocation6], 1
    %374 = vsyncpa [#allocation9], 1
    %375 = vsyncpa [#allocation4], 1

</llo_original>
